<compile_context>
chip_gen: v7x
topology: tpu7x:2x2x1
jax: 0.10.0
libtpu: 0.0.40
codegen_flags: <defaults>
</compile_context>

<pallas_src>
import functools

import jax
import jax.numpy as jnp
import numpy as np
from jax.experimental import pallas as pl
from jax.experimental.pallas import tpu as pltpu


def _round_up(x, m):
    return ((x + m - 1) // m) * m


def _stft_power_kernel(w_ref, frames_ref, out_ref):
    """One (time-tile, batch) grid step of the freq-major windowed-DFT power spec.

    w_ref     : (2*F_sub, n_fft) bf16  rows [0, n_freq) = hann*cos, rows
                                       [F_sub, F_sub+n_freq) = -hann*sin, rest zero
    frames_ref: (n_fft, tT)      bf16  frame samples, time on lanes
    out_ref   : (F_sub, tT)      f32   |STFT|^2, freq on sublanes, time on lanes
    """
    f_sub = out_ref.shape[0]
    # single K=n_fft MXU pass; f32 accumulation
    res = jnp.dot(w_ref[...], frames_ref[...], preferred_element_type=jnp.float32)
    re = res[:f_sub, :]          # sublane-aligned slices (f_sub is a multiple of 8)
    im = res[f_sub:, :]
    out_ref[...] = re * re + im * im


@functools.partial(jax.jit, static_argnames=("n_fft", "hop_length", "time_tile"))
def audio_spectrogram(audio, *, n_fft=64, hop_length=None, time_tile=2048):
    """torchaudio.Spectrogram(power=2, center=True, onesided=True) equivalent.

    audio: [B, L] float32
    returns: [B, n_fft//2 + 1, 1 + L // hop_length] float32
    """
    if hop_length is None:
        hop_length = n_fft // 2
    if hop_length * 2 != n_fft:
        raise NotImplementedError("kernel assumes hop_length == n_fft // 2 (torchaudio default)")
    if time_tile % 128 != 0:
        raise ValueError("time_tile must be a multiple of 128 (lane width)")

    B, L = audio.shape
    hop = hop_length
    n_freq = n_fft // 2 + 1                       # 33 for n_fft=64
    n_frames = 1 + L // hop
    F_sub = _round_up(n_freq, 8)                  # 40: freq rows padded to sublane multiple

    # time tile: lane-multiple; keep >=2 tiles when possible (v7x megacore at B==1)
    tT = min(time_tile, _round_up(n_frames, 128))
    if _round_up(n_frames, 128) >= 256:
        tT = min(tT, _round_up((n_frames + 1) // 2, 128))
    T_pad = _round_up(n_frames, tT)

    # --- glue: reflect pad (center=True), bf16 cast, zero-pad to T_pad+1 hop chunks ----------
    pad = n_fft // 2
    padded = jnp.pad(audio, ((0, 0), (pad, pad)), mode="reflect").astype(jnp.bfloat16)
    total = (T_pad + 1) * hop
    padded = jnp.pad(padded, ((0, 0), (0, total - padded.shape[1])))
    chunks = padded.reshape(B, T_pad + 1, hop)
    # frame t = chunks[t] ++ chunks[t+1]; present it lane-dense & time-major-on-lanes:
    frames = jnp.concatenate([chunks[:, :T_pad, :], chunks[:, 1:, :]], axis=-1)  # (B,T_pad,n_fft)
    frames_t = jnp.transpose(frames, (0, 2, 1))                                  # (B,n_fft,T_pad)

    # --- glue: windowed DFT basis, real/imag stacked along sublanes, built in numpy ----------
    k = np.arange(n_fft)
    hann = 0.5 * (1.0 - np.cos(2.0 * np.pi * k / n_fft))                 # periodic Hann
    ang = 2.0 * np.pi * np.outer(np.arange(n_freq), k) / n_fft           # (n_freq, n_fft)
    w = np.zeros((2 * F_sub, n_fft), np.float32)
    w[:n_freq] = hann[None, :] * np.cos(ang)
    w[F_sub:F_sub + n_freq] = hann[None, :] * -np.sin(ang)
    w_bf = jnp.asarray(w, dtype=jnp.bfloat16)                            # 10 KB, resident

    cost = pl.CostEstimate(
        flops=2 * B * T_pad * n_fft * (2 * F_sub) + 3 * B * T_pad * F_sub,
        transcendentals=0,
        bytes_accessed=int(w_bf.size) * 2 + int(frames_t.size) * 2 + B * F_sub * T_pad * 4,
    )

    out_p = pl.pallas_call(
        _stft_power_kernel,
        out_shape=jax.ShapeDtypeStruct((B, F_sub, T_pad), jnp.float32),
        grid_spec=pltpu.PrefetchScalarGridSpec(
            num_scalar_prefetch=0,
            # time tiles outermost so megacore can split time when B==1
            grid=(T_pad // tT, B),
            in_specs=[
                # tiny basis: constant block index -> resident for the whole grid
                pl.BlockSpec((2 * F_sub, n_fft), lambda t, b: (0, 0)),
                # streamed frame tile: (n_fft sublanes, tT lanes), fully lane-dense
                pl.BlockSpec((None, n_fft, tT), lambda t, b: (b, 0, t)),
            ],
            out_specs=pl.BlockSpec((None, F_sub, tT), lambda t, b: (b, 0, t)),
        ),
        compiler_params=pltpu.CompilerParams(
            dimension_semantics=("parallel", "parallel")),
        cost_estimate=cost,
    )(w_bf, frames_t)

    # crop sublane/lane padding; already (B, freq, time) -> no transpose pass
    return out_p[:, :n_freq, :n_frames]


def _reference_spectrogram(audio, n_fft=64, hop_length=None):
    """Pure numpy reference mirroring torchaudio.Spectrogram defaults."""
    if hop_length is None:
        hop_length = n_fft // 2
    audio = np.asarray(audio, np.float64)
    B, L = audio.shape
    pad = n_fft // 2
    padded = np.pad(audio, ((0, 0), (pad, pad)), mode="reflect")
    n_frames = 1 + L // hop_length
    n_freq = n_fft // 2 + 1
    k = np.arange(n_fft)
    hann = 0.5 * (1.0 - np.cos(2.0 * np.pi * k / n_fft))
    out = np.zeros((B, n_freq, n_frames))
    for b in range(B):
        for t in range(n_frames):
            seg = padded[b, t * hop_length: t * hop_length + n_fft] * hann
            X = np.fft.rfft(seg, n=n_fft)
            out[b, :, t] = np.abs(X) ** 2
    return out.astype(np.float32)


if __name__ == "__main__":
    key = jax.random.PRNGKey(0)
    B, L = 2, 8192            # 257 frames -> exercises 2 time tiles + edge padding/crop
    n_fft = 64
    audio = jax.random.normal(key, (B, L), dtype=jnp.float32)

    # The module operates on item['audio']; emulate the dict pass-through.
    item = {"audio": audio}
    item["audio"] = audio_spectrogram(item["audio"], n_fft=n_fft)
    spec = jax.block_until_ready(item["audio"])

    ref = _reference_spectrogram(np.asarray(audio), n_fft=n_fft)
    assert spec.shape == ref.shape, (spec.shape, ref.shape)
    # bf16 operands (f32 MXU accumulation / f32 power math) vs f64 reference:
    # augmentation-grade tolerance.
    np.testing.assert_allclose(np.asarray(spec), ref, rtol=5e-2, atol=0.5)

    print("KERNEL_OK")
</pallas_src>

<mosaic_0001>
module attributes {stable_mosaic.version = 11 : i64} {
  func.func @_stft_power_kernel(%arg0: i32, %arg1: i32, %arg2: memref<80x64xbf16, #tpu.memory_space<vmem>>, %arg3: memref<1x64x256xbf16, #tpu.memory_space<vmem>>, %arg4: memref<1x40x256xf32, #tpu.memory_space<vmem>>) attributes {dimension_semantics = [#tpu.dimension_semantics<parallel>, #tpu.dimension_semantics<parallel>], iteration_bounds = array<i64: 2, 2>, scalar_prefetch = 0 : i64, scratch_operands = 0 : i64, tpu.core_type = #tpu.core_type<tc>, window_params = [{pipeline_mode = #tpu.pipeline_mode<synchronous>, transform_indices = @transform_0, window_bounds = array<i64: 80, 64>}, {transform_indices = @transform_1, window_bounds = array<i64: 1, 64, 256>}, {transform_indices = @transform_2, window_bounds = array<i64: 1, 40, 256>}]} {
    %c0 = arith.constant 0 : index
    %c0_0 = arith.constant 0 : index
    %0 = vector.load %arg2[%c0, %c0_0] : memref<80x64xbf16, #tpu.memory_space<vmem>>, vector<80x64xbf16>
    %c0_1 = arith.constant 0 : index
    %c0_2 = arith.constant 0 : index
    %c0_3 = arith.constant 0 : index
    %1 = vector.load %arg3[%c0_1, %c0_2, %c0_3] : memref<1x64x256xbf16, #tpu.memory_space<vmem>>, vector<1x64x256xbf16>
    %2 = vector.shape_cast %1 : vector<1x64x256xbf16> to vector<64x256xbf16>
    %cst = arith.constant dense<0.000000e+00> : vector<80x256xf32>
    %3 = tpu.matmul %0, %2, %cst {dimension_numbers = #tpu.dot_dimension_numbers<[1], [0], [0], [1], [0, 0, 1, 1], [], []>} : vector<80x64xbf16>, vector<64x256xbf16>, vector<80x256xf32> -> vector<80x256xf32>
    %4 = vector.extract_strided_slice %3 {offsets = [0, 0], sizes = [40, 256], strides = [1, 1]} : vector<80x256xf32> to vector<40x256xf32>
    %5 = vector.extract_strided_slice %3 {offsets = [40, 0], sizes = [40, 256], strides = [1, 1]} : vector<80x256xf32> to vector<40x256xf32>
    %6 = arith.mulf %4, %4 : vector<40x256xf32>
    %7 = arith.mulf %5, %5 : vector<40x256xf32>
    %8 = arith.addf %6, %7 : vector<40x256xf32>
    %c0_4 = arith.constant 0 : index
    %c0_5 = arith.constant 0 : index
    %c0_6 = arith.constant 0 : index
    %9 = vector.load %arg4[%c0_4, %c0_5, %c0_6] : memref<1x40x256xf32, #tpu.memory_space<vmem>>, vector<1x40x256xf32>
    %10 = vector.shape_cast %9 : vector<1x40x256xf32> to vector<40x256xf32>
    %11 = vector.shape_cast %8 : vector<40x256xf32> to vector<1x40x256xf32>
    tpu.vector_store %arg4[%c0_4, %c0_5, %c0_6], %11 {strides = array<i32>} : memref<1x40x256xf32, #tpu.memory_space<vmem>>, vector<1x40x256xf32>,
    return
  }
  func.func @transform_0(%arg0: i32, %arg1: i32) -> (i32, i32) {
    %c0_i32 = arith.constant 0 : i32
    %c0_i32_0 = arith.constant 0 : i32
    %c0_i32_1 = arith.constant 0 : i32
    return %c0_i32, %c0_i32_0 : i32, i32
  }
  func.func @transform_1(%arg0: i32, %arg1: i32) -> (i32, i32, i32) {
    %c0_i32 = arith.constant 0 : i32
    %c0_i32_0 = arith.constant 0 : i32
    return %arg1, %c0_i32, %arg0 : i32, i32, i32
  }
  func.func @transform_2(%arg0: i32, %arg1: i32) -> (i32, i32, i32) {
    %c0_i32 = arith.constant 0 : i32
    %c0_i32_0 = arith.constant 0 : i32
    return %arg1, %c0_i32, %arg0 : i32, i32, i32
  }
}

</mosaic_0001>

<llo_original>
// kernel: audio_spectrogram.1
$region0: #{audio_spectrogram.1}
  #allocation0 [shape = 'u32[]', space=smem, size = 0x4, offset = 0x4, fixed_abs, tag = 'smem constant byte address 0x4 - core index']
  #allocation1 [shape = 'u32[144,128]{1,0:T(1,128)}', space=vmem, size = 0x12000, scoped, tag = 'internal scratch']
  %s0 = inlined_call_operand.vmem [shape: bf16[80,64], index: 0, kind: input, shape index: {}]
  %s1 = inlined_call_operand.vmem [shape: bf16[2,64,512], index: 1, kind: input, shape index: {}]
  %s2 = inlined_call_operand.vmem [shape: f32[2,40,512], index: 2, kind: output, shape index: {}]
  %s3 = sld [smem:[#allocation0]]
  $region98: #{audio_spectrogram.1} parent=0
    _
  %s5 = ssub.s32 1, %s3
  %s6 = scalar_select 0, %s5, %s3
  $region1: #{audio_spectrogram.1} parent=0
    #allocation2 [shape = 'u8[65536]{0}', space=vmem, size = 0x10000, scoped, tag = 'input window, operand 1']
    #allocation3 [shape = 'u8[81920]{0}', space=vmem, size = 0x14000, scoped, tag = 'output window, operand 0']
    loop: start=0, step=1, limit=6
    $region2: #{audio_spectrogram.1} parent=1 // loop_pre_header
      _
    $region3: #{audio_spectrogram.1} parent=1 // loop_header
      %s8 = sphi 0, %s12
      %p9 = scmp.ge.s32.totalorder %s8, 6
      %s15 = sphi 0, %s27
      %s16 = sphi 0, %s23
      %s17 = sphi 0, %s15
      %s18 = sphi 0, %s16
      %s19 = sphi 0, %s17
      %s20 = sphi 0, %s18
      %s28 = sphi 0, %s28
      %s30 = sphi 0, %s28
      %s31 = sphi 0, %s30
      %s45 = sphi 0, %s31
      %s53 = sphi 0, %s55
      %s56 = sphi 0, %s53
      %s57 = sphi 0, %s56
      %s73 = sphi 0, %s57
      %s81 = sphi 0, %s83
      %s84 = sphi 0, %s81
      %s85 = sphi 0, %s84
      %s101 = sphi 0, %s85
    $region4: #{audio_spectrogram.1} parent=1 // loop_header_branch
      %11 = sbr.rel (%p9) target = $region8
    $region5: #{audio_spectrogram.1} parent=1 // loop_body
      %s13 = ssub.s32 %s8, 1
      %s14 = ssub.s32 %s8, 2
      %s21 = sadd.s32 1, %s16
      %p22 = scmp.ge.s32.totalorder %s21, 2
      %s23 = scalar_select %p22, 0, %s21
      %s24 = sadd.s32 1, %s15
      %s25 = scalar_select %p22, %s24, %s15
      %p26 = scmp.ge.s32.totalorder %s25, 2
      %s27 = scalar_select %p26, 0, %s25
      %s29 = sadd.s32 %s28, 1
      %p32 = scmp.eq.s32.totalorder %s8, 3
      %p33 = scmp.ne.s32.totalorder %s28, %s30
      %p34 = scmp.eq.s32.totalorder %s8, 0
      %p35 = por %p33, %p34
      %p36 = scmp.ne.s32.totalorder %s28, %s30
      %p37 = scmp.eq.s32.totalorder %s13, 3
      %p38 = por %p36, %p37
      %p39 = scmp.ne.s32.totalorder %s30, %s31
      %p40 = scmp.eq.s32.totalorder %s13, 0
      %p41 = por %p39, %p40
      %p42 = scmp.ne.s32.totalorder %s30, %s31
      %p43 = scmp.eq.s32.totalorder %s14, 3
      %p44 = por %p42, %p43
      %p46 = scmp.ne.s32.totalorder %s31, %s45
      %p47 = scmp.eq.s32.totalorder %s14, 0
      %p48 = por %p46, %p47
      %s49 = ssub.s32 %s16, %s23
      %s50 = ssub.s32 %s15, %s27
      %s51 = sor.u32 %s49, %s50
      %p52 = scmp.eq.s32.totalorder %s51, 0
      %s54 = sadd.s32 %s53, 1
      %s55 = scalar_select %p52, %s53, %s54
      %p58 = pneg %p52
      %p59 = scmp.eq.s32.totalorder %s8, 3
      %p60 = por %p58, %p59
      %p61 = scmp.ne.s32.totalorder %s53, %s56
      %p62 = scmp.eq.s32.totalorder %s8, 0
      %p63 = por %p61, %p62
      %p64 = scmp.ne.s32.totalorder %s53, %s56
      %p65 = scmp.eq.s32.totalorder %s13, 3
      %p66 = por %p64, %p65
      %p67 = scmp.ne.s32.totalorder %s56, %s57
      %p68 = scmp.eq.s32.totalorder %s13, 0
      %p69 = por %p67, %p68
      %p70 = scmp.ne.s32.totalorder %s56, %s57
      %p71 = scmp.eq.s32.totalorder %s14, 3
      %p72 = por %p70, %p71
      %p74 = scmp.ne.s32.totalorder %s57, %s73
      %p75 = scmp.eq.s32.totalorder %s14, 0
      %p76 = por %p74, %p75
      %s77 = ssub.s32 %s16, %s23
      %s78 = ssub.s32 %s15, %s27
      %s79 = sor.u32 %s77, %s78
      %p80 = scmp.eq.s32.totalorder %s79, 0
      %s82 = sadd.s32 %s81, 1
      %s83 = scalar_select %p80, %s81, %s82
      %p86 = pneg %p80
      %p87 = scmp.eq.s32.totalorder %s8, 3
      %p88 = por %p86, %p87
      %p89 = scmp.ne.s32.totalorder %s81, %s84
      %p90 = scmp.eq.s32.totalorder %s8, 0
      %p91 = por %p89, %p90
      %p92 = scmp.ne.s32.totalorder %s81, %s84
      %p93 = scmp.eq.s32.totalorder %s13, 3
      %p94 = por %p92, %p93
      %p95 = scmp.ne.s32.totalorder %s84, %s85
      %p96 = scmp.eq.s32.totalorder %s13, 0
      %p97 = por %p95, %p96
      %p98 = scmp.ne.s32.totalorder %s84, %s85
      %p99 = scmp.eq.s32.totalorder %s14, 3
      %p100 = por %p98, %p99
      %p102 = scmp.ne.s32.totalorder %s85, %s101
      %p103 = scmp.eq.s32.totalorder %s14, 0
      %p104 = por %p102, %p103
      %p105 = scmp.le.s32.totalorder 1, %s8
      %p106 = scmp.lt.s32.totalorder %s8, 5
      %p107 = pnand %p105, %p106
      %p108 = pneg %p107
      // Predicated region
      $region9: #{audio_spectrogram.1} parent=5 // pred_check
        _
      $region10: #{audio_spectrogram.1} parent=5 // pred_check_branch
        %110 = sbr.rel (%p107) target = $region12
      $region11: #{audio_spectrogram.1} parent=5 // pred_region
        %s111 = ssub.s32 %s8, 1
        // Predicated region
        $region13: #{audio_spectrogram.1} parent=11 // pred_check
          %p112 = pneg %p41
        $region14: #{audio_spectrogram.1} parent=11 // pred_check_branch
          %114 = sbr.rel (%p112) target = $region16
        $region15: #{audio_spectrogram.1} parent=11 // pred_region
          _
        $region16: #{audio_spectrogram.1} parent=11 // pred_fallthru
          _
      $region12: #{audio_spectrogram.1} parent=5 // pred_fallthru
        _
      %p115 = scmp.lt.s32.totalorder %s8, 4
      // Predicated region
      $region17: #{audio_spectrogram.1} parent=5 // pred_check
        %p116 = pneg %p115
      $region18: #{audio_spectrogram.1} parent=5 // pred_check_branch
        %118 = sbr.rel (%p116) target = $region20
      $region19: #{audio_spectrogram.1} parent=5 // pred_region
        // Predicated region
        $region21: #{audio_spectrogram.1} parent=19 // pred_check
          %p119 = pneg %p63
        $region22: #{audio_spectrogram.1} parent=19 // pred_check_branch
          %121 = sbr.rel (%p119) target = $region24
        $region23: #{audio_spectrogram.1} parent=19 // pred_region
          %s122 = sand.u32 %s53, 1
          %s123 = sand.u32 %s53, 1
          %s124 = smul.addr %s123, 64
          %s125 = scalar_lea.vmem [#allocation2], %s124
          %s126 = smul.u32 2, %s15
          %s127 = smul.addr %s16, 32
          %s128 = sadd.s32 %s126, %s127
          %s129 = smul.addr %s128, 4
          %s130 = scalar_lea.vmem %s1, %s129
          // Predicated region
          $region25: #{audio_spectrogram.1} parent=23 // pred_check
            _
          $region26: #{audio_spectrogram.1} parent=23 // pred_check_branch
            %132 = sbr.rel (0) target = $region28
          $region27: #{audio_spectrogram.1} parent=23 // pred_region
            // Predicated region
            $region29: #{audio_spectrogram.1} parent=27 // pred_check
              _
            $region30: #{audio_spectrogram.1} parent=27 // pred_check_branch
              %134 = sbr.rel (0) target = $region32
            $region31: #{audio_spectrogram.1} parent=27 // pred_region
              // Predicated region
              $region44: #{audio_spectrogram.1} parent=31 // pred_check
                _
              $region45: #{audio_spectrogram.1} parent=31 // pred_check_branch
                %163 = sbr.rel (0) target = $region47
              $region46: #{audio_spectrogram.1} parent=31 // pred_region
                loop: start=0, step=1, limit=1
                $region48: #{audio_spectrogram.1} parent=46 // loop_pre_header
                  _
                $region49: #{audio_spectrogram.1} parent=46 // loop_header
                  %s165 = sphi 0, %s169
                  %p166 = scmp.ge.s32.totalorder %s165, 1
                  %s170 = sphi %s130, %s130
                  %s171 = sphi %s125, %s125
                $region50: #{audio_spectrogram.1} parent=46 // loop_header_branch
                  %168 = sbr.rel (%p166) target = $region54
                $region51: #{audio_spectrogram.1} parent=46 // loop_body
                  %v172 = vld [vmem:[%s170] sm:$0xff]
                  %173 = vst [vmem:[%s171] sm:$0xff] %v172
                  %v174 = vld [vmem:[%s170 + $0x10] sm:$0xff]
                  %175 = vst [vmem:[%s171 + $0x8] sm:$0xff] %v174
                  %v176 = vld [vmem:[%s170 + $0x20] sm:$0xff]
                  %177 = vst [vmem:[%s171 + $0x10] sm:$0xff] %v176
                  %v178 = vld [vmem:[%s170 + $0x30] sm:$0xff]
                  %179 = vst [vmem:[%s171 + $0x18] sm:$0xff] %v178
                  %v180 = vld [vmem:[%s170 + $0x40] sm:$0xff]
                  %181 = vst [vmem:[%s171 + $0x20] sm:$0xff] %v180
                  %v182 = vld [vmem:[%s170 + $0x50] sm:$0xff]
                  %183 = vst [vmem:[%s171 + $0x28] sm:$0xff] %v182
                  %v184 = vld [vmem:[%s170 + $0x60] sm:$0xff]
                  %185 = vst [vmem:[%s171 + $0x30] sm:$0xff] %v184
                  %v186 = vld [vmem:[%s170 + $0x70] sm:$0xff]
                  %187 = vst [vmem:[%s171 + $0x38] sm:$0xff] %v186
                $region52: #{audio_spectrogram.1} parent=46 // loop_footer
                  %s169 = sadd.s32 1, %s165
                $region53: #{audio_spectrogram.1} parent=46 // loop_footer_branch
                  %164 = sbr.rel target = $region49
                $region54: #{audio_spectrogram.1} parent=46 // loop_exit
                  _
              $region47: #{audio_spectrogram.1} parent=31 // pred_fallthru
                _
              // Predicated region
              $region55: #{audio_spectrogram.1} parent=31 // pred_check
                _
              $region56: #{audio_spectrogram.1} parent=31 // pred_check_branch
                %189 = sbr.rel target = $region58
              $region57: #{audio_spectrogram.1} parent=31 // pred_region
                _
              $region58: #{audio_spectrogram.1} parent=31 // pred_fallthru
                _
            $region32: #{audio_spectrogram.1} parent=27 // pred_fallthru
              _
            // Predicated region
            $region33: #{audio_spectrogram.1} parent=27 // pred_check
              _
            $region34: #{audio_spectrogram.1} parent=27 // pred_check_branch
              %136 = sbr.rel target = $region36
            $region35: #{audio_spectrogram.1} parent=27 // pred_region
              loop: start=0, step=1, limit=1
              $region37: #{audio_spectrogram.1} parent=35 // loop_pre_header
                _
              $region38: #{audio_spectrogram.1} parent=35 // loop_header
                %s139 = sphi 0, %s143
                %p140 = scmp.ge.s32.totalorder %s139, 1
                %s144 = sphi %s130, %s130
                %s145 = sphi %s125, %s125
              $region39: #{audio_spectrogram.1} parent=35 // loop_header_branch
                %142 = sbr.rel (%p140) target = $region43
              $region40: #{audio_spectrogram.1} parent=35 // loop_body
                %v146 = vld [vmem:[%s144] sm:$0xff]
                %147 = vst [vmem:[%s145] sm:$0xff] %v146
                %v148 = vld [vmem:[%s144 + $0x10] sm:$0xff]
                %149 = vst [vmem:[%s145 + $0x8] sm:$0xff] %v148
                %v150 = vld [vmem:[%s144 + $0x20] sm:$0xff]
                %151 = vst [vmem:[%s145 + $0x10] sm:$0xff] %v150
                %v152 = vld [vmem:[%s144 + $0x30] sm:$0xff]
                %153 = vst [vmem:[%s145 + $0x18] sm:$0xff] %v152
                %v154 = vld [vmem:[%s144 + $0x40] sm:$0xff]
                %155 = vst [vmem:[%s145 + $0x20] sm:$0xff] %v154
                %v156 = vld [vmem:[%s144 + $0x50] sm:$0xff]
                %157 = vst [vmem:[%s145 + $0x28] sm:$0xff] %v156
                %v158 = vld [vmem:[%s144 + $0x60] sm:$0xff]
                %159 = vst [vmem:[%s145 + $0x30] sm:$0xff] %v158
                %v160 = vld [vmem:[%s144 + $0x70] sm:$0xff]
                %161 = vst [vmem:[%s145 + $0x38] sm:$0xff] %v160
              $region41: #{audio_spectrogram.1} parent=35 // loop_footer
                %s143 = sadd.s32 1, %s139
              $region42: #{audio_spectrogram.1} parent=35 // loop_footer_branch
                %138 = sbr.rel target = $region38
              $region43: #{audio_spectrogram.1} parent=35 // loop_exit
                _
            $region36: #{audio_spectrogram.1} parent=27 // pred_fallthru
              _
          $region28: #{audio_spectrogram.1} parent=23 // pred_fallthru
            _
          %190 = vnop
        $region24: #{audio_spectrogram.1} parent=19 // pred_fallthru
          _
      $region20: #{audio_spectrogram.1} parent=5 // pred_fallthru
        _
      %p191 = scmp.le.s32.totalorder 1, %s8
      %p192 = scmp.lt.s32.totalorder %s8, 5
      %p193 = pnand %p191, %p192
      %p194 = pneg %p193
      // Predicated region
      $region59: #{audio_spectrogram.1} parent=5 // pred_check
        _
      $region60: #{audio_spectrogram.1} parent=5 // pred_check_branch
        %196 = sbr.rel (%p193) target = $region62
      $region61: #{audio_spectrogram.1} parent=5 // pred_region
        %s197 = ssub.s32 %s8, 1
        %s198 = sand.u32 %s56, 1
        %s199 = sand.u32 %s56, 1
        %s200 = smul.addr %s199, 64
        %s201 = scalar_lea.vmem [#allocation2], %s200
        // Predicated region
        $region63: #{audio_spectrogram.1} parent=61 // pred_check
          %p202 = pneg %p69
        $region64: #{audio_spectrogram.1} parent=61 // pred_check_branch
          %204 = sbr.rel (%p202) target = $region66
        $region65: #{audio_spectrogram.1} parent=61 // pred_region
          _
        $region66: #{audio_spectrogram.1} parent=61 // pred_fallthru
          _
        %p205 = pneg %p41
        %p206 = pneg %p38
        %s207 = sand.u32 %s56, 1
        %s208 = sand.u32 %s56, 1
        %s209 = smul.addr %s208, 64
        %s210 = scalar_lea.vmem [#allocation2], %s209
        %p211 = pneg %p69
        %p212 = pneg %p66
        %p213 = pneg %p97
        %p214 = pneg %p94
        %s215 = sand.u32 %s84, 1
        %s216 = sand.u32 %s84, 1
        %s217 = smul.addr %s216, 80
        %s218 = scalar_lea.vmem [#allocation3], %s217
        %s219 = smul.u32 2, %s17
        %s220 = smul.u32 2, %s17
        %v222 = vld [vmem:[%s0] sm:$0xf]
        %v223 = vld [vmem:[%s0 + $0x4] sm:$0xf]
        %v224 = vld [vmem:[%s0 + $0x8] sm:$0xf]
        %v225 = vld [vmem:[%s0 + $0xc] sm:$0xf]
        %v226 = vld [vmem:[%s0 + $0x10] sm:$0xf]
        %v227 = vld [vmem:[%s0 + $0x14] sm:$0xf]
        %v228 = vld [vmem:[%s0 + $0x18] sm:$0xf]
        %v229 = vld [vmem:[%s0 + $0x1c] sm:$0xf]
        %v230 = vld [vmem:[%s0 + $0x20] sm:$0xf]
        %v231 = vld [vmem:[%s0 + $0x24] sm:$0xf]
        %v232 = vld [vmem:[%s201] sm:$0xff]
        %v233 = vld [vmem:[%s201 + $0x8] sm:$0xff]
        %v234 = vld [vmem:[%s201 + $0x10] sm:$0xff]
        %v235 = vld [vmem:[%s201 + $0x18] sm:$0xff]
        %v236 = vld [vmem:[%s201 + $0x20] sm:$0xff]
        %v237 = vld [vmem:[%s201 + $0x28] sm:$0xff]
        %v238 = vld [vmem:[%s201 + $0x30] sm:$0xff]
        %v239 = vld [vmem:[%s201 + $0x38] sm:$0xff]
        %v250 = vunpack.c.l.b16 %v222
        %v251 = vunpack.c.l.b16 %v223
        %v252 = vunpack.c.l.b16 %v224
        %v253 = vunpack.c.l.b16 %v225
        %v254 = vunpack.c.l.b16 %v226
        %v255 = vunpack.c.l.b16 %v227
        %v256 = vunpack.c.l.b16 %v228
        %v257 = vunpack.c.l.b16 %v229
        %v258 = vunpack.c.l.b16 %v230
        %v259 = vunpack.c.l.b16 %v231
        %v260 = vpack.c.b16 %v251, %v250
        %v261 = vpack.c.b16 %v253, %v252
        %v262 = vpack.c.b16 %v255, %v254
        %v263 = vpack.c.b16 %v257, %v256
        %v264 = vpack.c.b16 %v259, %v258
        %v273 = vunpack.c.l.b16 %v232
        %v274 = vunpack.c.h.b16 %v232
        %v275 = vunpack.c.l.b16 %v233
        %v276 = vunpack.c.h.b16 %v233
        %v277 = vunpack.c.l.b16 %v234
        %v278 = vunpack.c.h.b16 %v234
        %v279 = vunpack.c.l.b16 %v235
        %v280 = vunpack.c.h.b16 %v235
        %v281 = vunpack.c.l.b16 %v236
        %v282 = vunpack.c.h.b16 %v236
        %v283 = vunpack.c.l.b16 %v237
        %v284 = vunpack.c.h.b16 %v237
        %v285 = vunpack.c.l.b16 %v238
        %v286 = vunpack.c.h.b16 %v238
        %v287 = vunpack.c.l.b16 %v239
        %v288 = vunpack.c.h.b16 %v239
        %v289 = vpack.c.b16 %v275, %v273
        %v290 = vpack.c.b16 %v276, %v274
        %v291 = vpack.c.b16 %v279, %v277
        %v292 = vpack.c.b16 %v280, %v278
        %v293 = vpack.c.b16 %v283, %v281
        %v294 = vpack.c.b16 %v284, %v282
        %v295 = vpack.c.b16 %v287, %v285
        %v296 = vpack.c.b16 %v288, %v286
        %vm305 = vcmask 523264
        %v307 = vsel %vm305, %v260, 0
        %v310 = vsel %vm305, %v261, 0
        %v313 = vsel %vm305, %v262, 0
        %v316 = vsel %vm305, %v263, 0
        %v319 = vsel %vm305, %v264, 0
        %321 = vmatprep.subr.bf16.mxu0 %v290
        %322 = vmatpush1.bf16.msra.mxu0 %v289
        %323 = vmatprep.subr.bf16.mxu0 %v292
        %324 = vmatpush1.bf16.msra.mxu0 %v291
        %325 = vmatprep.subr.bf16.mxu0 %v294
        %326 = vmatpush1.bf16.msra.mxu0 %v293
        %327 = vmatprep.subr.bf16.mxu0 %v296
        %328 = vmatpush1.bf16.msra.mxu0 %v295
        %329 = vmatprep.subr.bf16.mxu0 0
        %330 = vmatpush1.bf16.msra.mxu0 0
        %331 = vmatprep.subr.bf16.mxu0 0
        %332 = vmatpush1.bf16.msra.mxu0 0
        %333 = vmatprep.subr.bf16.mxu0 0
        %334 = vmatpush1.bf16.msra.mxu0 0
        %335 = vmatprep.subr.bf16.mxu0 0
        %336 = vmatpush1.bf16.msra.mxu0 0
        %337 = vmatprep.subr.bf16.mxu0 0
        %338 = vmatpush1.bf16.msra.mxu0 0
        %339 = vmatprep.subr.bf16.mxu0 0
        %340 = vmatpush1.bf16.msra.mxu0 0
        %341 = vmatprep.subr.bf16.mxu0 0
        %342 = vmatpush1.bf16.msra.mxu0 0
        %343 = vmatprep.subr.bf16.mxu0 0
        %344 = vmatpush1.bf16.msra.mxu0 0
        %345 = vmatprep.subr.bf16.mxu0 0
        %346 = vmatpush1.bf16.msra.mxu0 0
        %347 = vmatprep.subr.bf16.mxu0 0
        %348 = vmatpush1.bf16.msra.mxu0 0
        %349 = vmatprep.subr.bf16.mxu0 0
        %350 = vmatpush1.bf16.msra.mxu0 0
        %351 = vmatprep.subr.bf16.mxu0 0
        %352 = vmatpush1.bf16.msra.mxu0 0
        %353 = vmatprep.mubr.bf16.mxu0 0
        %354 = vmatmul.mubr.bf16.gmra.mrb[0].mxu0 %v307
        %v355 = vpop.f32.mrb[0].mxu0
        %v356 = vadd.f32 0.0, %v355
        %v357 = vpop.f32.mrb[0].mxu0
        %v358 = vadd.f32 0.0, %v357
        %v359 = vpop.f32.mrb[0].mxu0
        %v360 = vadd.f32 0.0, %v359
        %v361 = vpop.f32.mrb[0].mxu0
        %v362 = vadd.f32 0.0, %v361
        %363 = vmatprep.mubr.bf16.mxu0 0
        %364 = vmatmul.mubr.bf16.gmra.mrb[0].mxu0 %v310
        %v365 = vpop.f32.mrb[0].mxu0
        %v366 = vadd.f32 0.0, %v365
        %v367 = vpop.f32.mrb[0].mxu0
        %v368 = vadd.f32 0.0, %v367
        %v369 = vpop.f32.mrb[0].mxu0
        %v370 = vadd.f32 0.0, %v369
        %v371 = vpop.f32.mrb[0].mxu0
        %v372 = vadd.f32 0.0, %v371
        %373 = vmatprep.mubr.bf16.mxu0 0
        %374 = vmatmul.mubr.bf16.gmra.mrb[0].mxu0 %v313
        %v375 = vpop.f32.mrb[0].mxu0
        %v376 = vadd.f32 0.0, %v375
        %v377 = vpop.f32.mrb[0].mxu0
        %v378 = vadd.f32 0.0, %v377
        %v379 = vpop.f32.mrb[0].mxu0
        %v380 = vadd.f32 0.0, %v379
        %v381 = vpop.f32.mrb[0].mxu0
        %v382 = vadd.f32 0.0, %v381
        %383 = vmatprep.mubr.bf16.mxu0 0
        %384 = vmatmul.mubr.bf16.gmra.mrb[0].mxu0 %v316
        %v385 = vpop.f32.mrb[0].mxu0
        %v386 = vadd.f32 0.0, %v385
        %v387 = vpop.f32.mrb[0].mxu0
        %v388 = vadd.f32 0.0, %v387
        %v389 = vpop.f32.mrb[0].mxu0
        %v390 = vadd.f32 0.0, %v389
        %v391 = vpop.f32.mrb[0].mxu0
        %v392 = vadd.f32 0.0, %v391
        %393 = vmatprep.mubr.bf16.mxu0 0
        %394 = vmatmul.mubr.bf16.gmra.mrb[0].mxu0 %v319
        %v395 = vpop.f32.mrb[0].mxu0
        %v396 = vadd.f32 0.0, %v395
        %v397 = vpop.f32.mrb[0].mxu0
        %v398 = vadd.f32 0.0, %v397
        %v399 = vpop.f32.mrb[0].mxu0
        %v400 = vadd.f32 0.0, %v399
        %v401 = vpop.f32.mrb[0].mxu0
        %v402 = vadd.f32 0.0, %v401
        %403 = vdwg.mxu0
        %v404 = vmul.f32 %v356, %v356
        %v405 = vmul.f32 %v358, %v358
        %v406 = vmul.f32 %v360, %v360
        %v407 = vmul.f32 %v362, %v362
        %v408 = vmul.f32 %v366, %v366
        %v409 = vmul.f32 %v368, %v368
        %v410 = vmul.f32 %v370, %v370
        %v411 = vmul.f32 %v372, %v372
        %v412 = vmul.f32 %v376, %v376
        %v413 = vmul.f32 %v378, %v378
        %v414 = vmul.f32 %v380, %v380
        %v415 = vmul.f32 %v382, %v382
        %v416 = vmul.f32 %v386, %v386
        %v417 = vmul.f32 %v388, %v388
        %v418 = vmul.f32 %v390, %v390
        %v419 = vmul.f32 %v392, %v392
        %v420 = vmul.f32 %v396, %v396
        %v421 = vmul.f32 %v398, %v398
        %v422 = vmul.f32 %v400, %v400
        %v423 = vmul.f32 %v402, %v402
        %v424 = vadd.f32 %v404, %v414
        %v425 = vadd.f32 %v405, %v415
        %v426 = vadd.f32 %v406, %v416
        %v427 = vadd.f32 %v407, %v417
        %v428 = vadd.f32 %v408, %v418
        %v429 = vadd.f32 %v409, %v419
        %v430 = vadd.f32 %v410, %v420
        %v431 = vadd.f32 %v411, %v421
        %v432 = vadd.f32 %v412, %v422
        %v433 = vadd.f32 %v413, %v423
        %434 = vst [vmem:[%s218] sm:$0xff] %v424
        %435 = vst [vmem:[%s218 + $0x8] sm:$0xff] %v425
        %436 = vst [vmem:[%s218 + $0x10] sm:$0xff] %v426
        %437 = vst [vmem:[%s218 + $0x18] sm:$0xff] %v427
        %438 = vst [vmem:[%s218 + $0x20] sm:$0xff] %v428
        %439 = vst [vmem:[%s218 + $0x28] sm:$0xff] %v429
        %440 = vst [vmem:[%s218 + $0x30] sm:$0xff] %v430
        %441 = vst [vmem:[%s218 + $0x38] sm:$0xff] %v431
        %442 = vst [vmem:[%s218 + $0x40] sm:$0xff] %v432
        %443 = vst [vmem:[%s218 + $0x48] sm:$0xff] %v433
        %s444 = sand.u32 %s84, 1
        %s445 = sand.u32 %s84, 1
        %s446 = smul.addr %s445, 80
        %s447 = scalar_lea.vmem [#allocation3], %s446
        // Predicated region
        $region67: #{audio_spectrogram.1} parent=61 // pred_check
          %p448 = pneg %p94
        $region68: #{audio_spectrogram.1} parent=61 // pred_check_branch
          %450 = sbr.rel (%p448) target = $region70
        $region69: #{audio_spectrogram.1} parent=61 // pred_region
          %s451 = smul.u32 2, %s17
          %s452 = smul.addr %s18, 20
          %s453 = sadd.s32 %s451, %s452
          %s454 = smul.addr %s453, 8
          %s455 = scalar_lea.vmem %s2, %s454
          // Predicated region
          $region71: #{audio_spectrogram.1} parent=69 // pred_check
            _
          $region72: #{audio_spectrogram.1} parent=69 // pred_check_branch
            %457 = sbr.rel (0) target = $region74
          $region73: #{audio_spectrogram.1} parent=69 // pred_region
            // Predicated region
            $region75: #{audio_spectrogram.1} parent=73 // pred_check
              _
            $region76: #{audio_spectrogram.1} parent=73 // pred_check_branch
              %459 = sbr.rel (0) target = $region78
            $region77: #{audio_spectrogram.1} parent=73 // pred_region
              loop: start=0, step=1, limit=1
              $region79: #{audio_spectrogram.1} parent=77 // loop_pre_header
                _
              $region80: #{audio_spectrogram.1} parent=77 // loop_header
                %s461 = sphi 0, %s465
                %p462 = scmp.ge.s32.totalorder %s461, 1
                %s466 = sphi %s447, %s447
                %s467 = sphi %s455, %s455
              $region81: #{audio_spectrogram.1} parent=77 // loop_header_branch
                %464 = sbr.rel (%p462) target = $region85
              $region82: #{audio_spectrogram.1} parent=77 // loop_body
                %v468 = vld [vmem:[%s466] sm:$0xff]
                %469 = vst [vmem:[%s467] sm:$0xff] %v468
                %v470 = vld [vmem:[%s466 + $0x8] sm:$0xff]
                %471 = vst [vmem:[%s467 + $0x8] sm:$0xff] %v470
                %v472 = vld [vmem:[%s466 + $0x10] sm:$0xff]
                %473 = vst [vmem:[%s467 + $0x20] sm:$0xff] %v472
                %v474 = vld [vmem:[%s466 + $0x18] sm:$0xff]
                %475 = vst [vmem:[%s467 + $0x28] sm:$0xff] %v474
                %v476 = vld [vmem:[%s466 + $0x20] sm:$0xff]
                %477 = vst [vmem:[%s467 + $0x40] sm:$0xff] %v476
                %v478 = vld [vmem:[%s466 + $0x28] sm:$0xff]
                %479 = vst [vmem:[%s467 + $0x48] sm:$0xff] %v478
                %v480 = vld [vmem:[%s466 + $0x30] sm:$0xff]
                %481 = vst [vmem:[%s467 + $0x60] sm:$0xff] %v480
                %v482 = vld [vmem:[%s466 + $0x38] sm:$0xff]
                %483 = vst [vmem:[%s467 + $0x68] sm:$0xff] %v482
                %v484 = vld [vmem:[%s466 + $0x40] sm:$0xff]
                %485 = vst [vmem:[%s467 + $0x80] sm:$0xff] %v484
                %v486 = vld [vmem:[%s466 + $0x48] sm:$0xff]
                %487 = vst [vmem:[%s467 + $0x88] sm:$0xff] %v486
              $region83: #{audio_spectrogram.1} parent=77 // loop_footer
                %s465 = sadd.s32 1, %s461
              $region84: #{audio_spectrogram.1} parent=77 // loop_footer_branch
                %460 = sbr.rel target = $region80
              $region85: #{audio_spectrogram.1} parent=77 // loop_exit
                _
            $region78: #{audio_spectrogram.1} parent=73 // pred_fallthru
              _
            // Predicated region
            $region86: #{audio_spectrogram.1} parent=73 // pred_check
              _
            $region87: #{audio_spectrogram.1} parent=73 // pred_check_branch
              %489 = sbr.rel target = $region89
            $region88: #{audio_spectrogram.1} parent=73 // pred_region
              _
            $region89: #{audio_spectrogram.1} parent=73 // pred_fallthru
              _
          $region74: #{audio_spectrogram.1} parent=69 // pred_fallthru
            _
          %490 = vnop
        $region70: #{audio_spectrogram.1} parent=61 // pred_fallthru
          _
      $region62: #{audio_spectrogram.1} parent=5 // pred_fallthru
        _
      %p491 = scmp.le.s32.totalorder 2, %s8
      // Predicated region
      $region90: #{audio_spectrogram.1} parent=5 // pred_check
        %p492 = pneg %p491
      $region91: #{audio_spectrogram.1} parent=5 // pred_check_branch
        %494 = sbr.rel (%p492) target = $region93
      $region92: #{audio_spectrogram.1} parent=5 // pred_region
        %s495 = ssub.s32 %s8, 2
        // Predicated region
        $region94: #{audio_spectrogram.1} parent=92 // pred_check
          %p496 = pneg %p100
        $region95: #{audio_spectrogram.1} parent=92 // pred_check_branch
          %498 = sbr.rel (%p496) target = $region97
        $region96: #{audio_spectrogram.1} parent=92 // pred_region
          %s499 = sand.u32 %s85, 1
          %s500 = sand.u32 %s85, 1
          %s501 = smul.addr %s500, 80
          %s502 = scalar_lea.vmem [#allocation3], %s501
        $region97: #{audio_spectrogram.1} parent=92 // pred_fallthru
          _
      $region93: #{audio_spectrogram.1} parent=5 // pred_fallthru
        _
    $region6: #{audio_spectrogram.1} parent=1 // loop_footer
      %s12 = sadd.s32 1, %s8
    $region7: #{audio_spectrogram.1} parent=1 // loop_footer_branch
      %7 = sbr.rel target = $region3
    $region8: #{audio_spectrogram.1} parent=1 // loop_exit
      _

</llo_original>
